<compile_context>
chip_gen: v5e
topology: v5e:2x2
jax: 0.10.0
libtpu: 0.0.40
codegen_flags: <defaults>
</compile_context>

<pallas_src>
import functools

import jax
import jax.numpy as jnp
from jax import lax
from jax.experimental import pallas as pl
from jax.experimental.pallas import tpu as pltpu

LANES = 128
SUBLANES = 8
MAX_TILE_M = 4096          # rows per DMA tile: 4096*128*4B = 2 MiB per input buffer
CHUNK_M = 512              # rows per in-kernel compute chunk (256 KiB f32 temporaries)
VMEM_LIMIT_BYTES = 32 * 1024 * 1024   # headroom for 8 MiB pipeline bufs + temps,
                                      # safe on v5e/v6e (128 MiB) and v7x (64 MiB)


def _round_up(x, m):
    return ((x + m - 1) // m) * m


def _focal_kernel(pred_ref, gt_ref, loss_ref, npos_ref, *,
                  tile_m, chunk_m, n_chunks, nblocks, valid_rows, need_mask):
    blk = pl.program_id(0)

    # Zero the resident (8,128) partial accumulators at the start of the sweep.
    @pl.when(blk == 0)
    def _():
        loss_ref[...] = jnp.zeros_like(loss_ref)
        npos_ref[...] = jnp.zeros_like(npos_ref)

    def sweep(masked):
        loss_acc = jnp.zeros((SUBLANES, LANES), jnp.float32)
        cnt_acc = jnp.zeros((SUBLANES, LANES), jnp.float32)
        # Statically unrolled chunk loop (n_chunks <= 8): DMA tile stays big,
        # compute chunk stays small so elementwise temporaries are bounded.
        for c in range(n_chunks):
            r0 = c * chunk_m            # static slice start -> zero runtime cost
            p = pred_ref[r0:r0 + chunk_m, :].astype(jnp.float32)
            g = gt_ref[r0:r0 + chunk_m, :].astype(jnp.float32)

            pos_sel = g == 1.0
            omp = 1.0 - p
            omg = 1.0 - g
            neg_w = omg * omg
            neg_w = neg_w * neg_w                        # (1 - gt)^4

            # Fused branches: one select for the weight, one log per element.
            #   positives: log(pred)   * (1-pred)^2
            #   negatives: log(1-pred) * pred^2 * (1-gt)^4
            w = jnp.where(pos_sel, omp * omp, p * p * neg_w)
            logv = jnp.log(jnp.where(pos_sel, p, omp))
            contrib = logv * w
            cnt = pos_sel.astype(jnp.float32)

            if masked:
                # NOTE: jnp.where is a true select — NaN/-inf produced by log()
                # on garbage rows past the logical end is discarded.  Never
                # rewrite this masking as `mask * contrib`.
                row_ids = (blk * tile_m + r0) + lax.broadcasted_iota(
                    jnp.int32, (chunk_m, LANES), 0)
                valid = row_ids < valid_rows
                contrib = jnp.where(valid, contrib, 0.0)
                cnt = jnp.where(valid, cnt, 0.0)

            # Reduce only down to an (8,128) slab (sublane-group add on the VPU);
            # the single cross-lane reduce happens once in the wrapper.
            loss_acc = loss_acc + contrib.reshape(
                chunk_m // SUBLANES, SUBLANES, LANES).sum(axis=0)
            cnt_acc = cnt_acc + cnt.reshape(
                chunk_m // SUBLANES, SUBLANES, LANES).sum(axis=0)

        loss_ref[...] += loss_acc
        npos_ref[...] += cnt_acc

    if not need_mask:
        sweep(False)
    elif nblocks == 1:
        sweep(True)
    else:
        # Only the last (ragged) block needs row-validity masking; every full
        # block takes the unmasked fast path.
        is_ragged = blk == nblocks - 1

        @pl.when(is_ragged)
        def _():
            sweep(True)

        @pl.when(jnp.logical_not(is_ragged))
        def _():
            sweep(False)


def focal_loss_pallas(pred, gt):
    """CornerNet focal loss. pred, gt: (B, C, H, W) float arrays (f32 or bf16)."""
    assert pred.shape == gt.shape
    pred_flat = pred.reshape(-1)
    gt_flat = gt.reshape(-1)
    n = pred_flat.shape[0]

    rows = n // LANES
    n_main = rows * LANES

    loss_sum = jnp.float32(0.0)
    num_pos = jnp.float32(0.0)

    if rows > 0:
        pred_2d = pred_flat[:n_main].reshape(rows, LANES)
        gt_2d = gt_flat[:n_main].reshape(rows, LANES)

        # Tile sizing: as big as the scoped-VMEM budget allows for bandwidth;
        # multiple of 16 rows so bf16 inputs stay sublane-packed.
        tile_m = min(MAX_TILE_M, _round_up(rows, 16))
        if tile_m <= CHUNK_M:
            chunk_m = tile_m
        else:
            tile_m = _round_up(tile_m, CHUNK_M)
            chunk_m = CHUNK_M
        n_chunks = tile_m // chunk_m
        nblocks = (rows + tile_m - 1) // tile_m
        coverage_rows = nblocks * tile_m
        # Invariant: masking must be enabled whenever the grid covers more rows
        # than logically exist (the ragged last block reads past the array end).
        need_mask = coverage_rows != rows
        assert coverage_rows >= rows
        assert need_mask == (coverage_rows != rows)

        kernel = functools.partial(
            _focal_kernel, tile_m=tile_m, chunk_m=chunk_m, n_chunks=n_chunks,
            nblocks=nblocks, valid_rows=rows, need_mask=need_mask)

        in_spec = pl.BlockSpec((tile_m, LANES), lambda i: (i, 0))
        out_spec = pl.BlockSpec((SUBLANES, LANES), lambda i: (0, 0))
        acc_shape = jax.ShapeDtypeStruct((SUBLANES, LANES), jnp.float32)

        bytes_per_elem = pred_2d.dtype.itemsize + gt_2d.dtype.itemsize
        cost = pl.CostEstimate(
            flops=13 * n_main,
            transcendentals=n_main,
            bytes_accessed=n_main * bytes_per_elem + 2 * SUBLANES * LANES * 4,
        )

        loss_parts, npos_parts = pl.pallas_call(
            kernel,
            out_shape=(acc_shape, acc_shape),
            grid_spec=pltpu.PrefetchScalarGridSpec(
                num_scalar_prefetch=0,
                grid=(nblocks,),
                in_specs=[in_spec, in_spec],
                out_specs=(out_spec, out_spec),
            ),
            compiler_params=pltpu.CompilerParams(
                dimension_semantics=("arbitrary",),
                vmem_limit_bytes=VMEM_LIMIT_BYTES),
            cost_estimate=cost,
        )(pred_2d, gt_2d)

        loss_sum = loss_sum + jnp.sum(loss_parts)
        num_pos = num_pos + jnp.sum(npos_parts)

    rem = n - n_main
    if rem:
        # Tail (< 128 elements): plain JAX — avoids padding/copying the whole
        # flattened input just for lane alignment.
        p_t = pred_flat[n_main:].astype(jnp.float32)
        g_t = gt_flat[n_main:].astype(jnp.float32)
        pm = g_t == 1.0
        omp = 1.0 - p_t
        omg = 1.0 - g_t
        nw = omg * omg
        nw = nw * nw
        lg = jnp.log(jnp.where(pm, p_t, omp))
        tail = lg * jnp.where(pm, omp * omp, p_t * p_t * nw)
        loss_sum = loss_sum + jnp.sum(tail)
        num_pos = num_pos + jnp.sum(pm.astype(jnp.float32))

    # pos_loss is exactly 0 when num_pos == 0, so -loss_sum == -neg_loss there.
    return jnp.where(num_pos == 0, -loss_sum, -loss_sum / num_pos)


def focal_loss_ref(pred, gt):
    """Pure-JAX reference mirroring the PyTorch _neg_loss."""
    pred = pred.astype(jnp.float32)
    gt = gt.astype(jnp.float32)
    pos_mask = gt == 1.0
    pos_inds = pos_mask.astype(jnp.float32)
    neg_inds = 1.0 - pos_inds
    neg_weights = (1.0 - gt) ** 4
    pos_loss = jnp.log(pred) * (1.0 - pred) ** 2 * pos_inds
    neg_loss = jnp.log(1.0 - pred) * pred**2 * neg_weights * neg_inds
    num_pos = pos_inds.sum()
    pos_sum = pos_loss.sum()
    neg_sum = neg_loss.sum()
    return jnp.where(num_pos == 0, -neg_sum, -(pos_sum + neg_sum) / num_pos)


if __name__ == "__main__":
    key = jax.random.PRNGKey(0)
    k1, k2, k3 = jax.random.split(key, 3)

    B, C, H, W = 2, 4, 16, 16
    # pred: sigmoid-like values strictly in (0, 1)
    pred = jax.nn.sigmoid(jax.random.normal(k1, (B, C, H, W), jnp.float32))
    # gt: mostly soft values in [0, 1), a few exact ones (positive centers)
    soft = 0.9 * jax.random.uniform(k2, (B, C, H, W), jnp.float32)
    ones_mask = jax.random.uniform(k3, (B, C, H, W)) > 0.97
    gt = jnp.where(ones_mask, 1.0, soft)

    out = focal_loss_pallas(pred, gt)
    out = jax.block_until_ready(out)

    ref = focal_loss_ref(pred, gt)
    assert jnp.allclose(out, ref, rtol=1e-5, atol=1e-5), (out, ref)

    print("KERNEL_OK")
</pallas_src>

<mosaic_0001>
module attributes {stable_mosaic.version = 11 : i64} {
  func.func @_focal_kernel(%arg0: i32, %arg1: memref<16x128xf32, #tpu.memory_space<vmem>>, %arg2: memref<16x128xf32, #tpu.memory_space<vmem>>, %arg3: memref<8x128xf32, #tpu.memory_space<vmem>>, %arg4: memref<8x128xf32, #tpu.memory_space<vmem>>) attributes {dimension_semantics = [#tpu.dimension_semantics<arbitrary>], iteration_bounds = array<i64: 1>, scalar_prefetch = 0 : i64, scratch_operands = 0 : i64, tpu.core_type = #tpu.core_type<tc>, window_params = [{transform_indices = @transform_0, window_bounds = array<i64: 16, 128>}, {transform_indices = @transform_1, window_bounds = array<i64: 16, 128>}, {pipeline_mode = #tpu.pipeline_mode<synchronous>, transform_indices = @transform_2, window_bounds = array<i64: 8, 128>}, {pipeline_mode = #tpu.pipeline_mode<synchronous>, transform_indices = @transform_3, window_bounds = array<i64: 8, 128>}]} {
    %c0_i32 = arith.constant 0 : i32
    %0 = arith.cmpi eq, %arg0, %c0_i32 : i32
    %1 = arith.extui %0 : i1 to i32
    %c0_i32_0 = arith.constant 0 : i32
    %2 = arith.cmpi ne, %1, %c0_i32_0 : i32
    scf.if %2 {
      %cst_18 = arith.constant 0.000000e+00 : f32
      %36 = vector.broadcast %cst_18 : f32 to vector<8x128xf32>
      %c0_19 = arith.constant 0 : index
      %c0_20 = arith.constant 0 : index
      %37 = vector.load %arg3[%c0_19, %c0_20] : memref<8x128xf32, #tpu.memory_space<vmem>>, vector<8x128xf32>
      tpu.vector_store %arg3[%c0_19, %c0_20], %36 {strides = array<i32>} : memref<8x128xf32, #tpu.memory_space<vmem>>, vector<8x128xf32>,
      %cst_21 = arith.constant 0.000000e+00 : f32
      %38 = vector.broadcast %cst_21 : f32 to vector<8x128xf32>
      %c0_22 = arith.constant 0 : index
      %c0_23 = arith.constant 0 : index
      %39 = vector.load %arg4[%c0_22, %c0_23] : memref<8x128xf32, #tpu.memory_space<vmem>>, vector<8x128xf32>
      tpu.vector_store %arg4[%c0_22, %c0_23], %38 {strides = array<i32>} : memref<8x128xf32, #tpu.memory_space<vmem>>, vector<8x128xf32>,
    } else {
    }
    %cst = arith.constant 0.000000e+00 : f32
    %3 = vector.broadcast %cst : f32 to vector<8x128xf32>
    %cst_1 = arith.constant 0.000000e+00 : f32
    %4 = vector.broadcast %cst_1 : f32 to vector<8x128xf32>
    %c0 = arith.constant 0 : index
    %c0_2 = arith.constant 0 : index
    %5 = vector.load %arg1[%c0, %c0_2] : memref<16x128xf32, #tpu.memory_space<vmem>>, vector<16x128xf32>
    %c0_3 = arith.constant 0 : index
    %c0_4 = arith.constant 0 : index
    %6 = vector.load %arg2[%c0_3, %c0_4] : memref<16x128xf32, #tpu.memory_space<vmem>>, vector<16x128xf32>
    %cst_5 = arith.constant 1.000000e+00 : f32
    %7 = vector.broadcast %cst_5 : f32 to vector<16x128xf32>
    %8 = arith.cmpf oeq, %6, %7 : vector<16x128xf32>
    %cst_6 = arith.constant 1.000000e+00 : f32
    %9 = vector.broadcast %cst_6 : f32 to vector<16x128xf32>
    %10 = arith.subf %9, %5 : vector<16x128xf32>
    %cst_7 = arith.constant 1.000000e+00 : f32
    %11 = vector.broadcast %cst_7 : f32 to vector<16x128xf32>
    %12 = arith.subf %11, %6 : vector<16x128xf32>
    %13 = arith.mulf %12, %12 : vector<16x128xf32>
    %14 = arith.mulf %13, %13 : vector<16x128xf32>
    %15 = arith.mulf %10, %10 : vector<16x128xf32>
    %16 = arith.mulf %5, %5 : vector<16x128xf32>
    %17 = arith.mulf %16, %14 : vector<16x128xf32>
    %18 = arith.select %8, %15, %17 : vector<16x128xi1>, vector<16x128xf32>
    %19 = arith.select %8, %5, %10 : vector<16x128xi1>, vector<16x128xf32>
    %20 = math.log %19 : vector<16x128xf32>
    %21 = arith.mulf %20, %18 : vector<16x128xf32>
    %22 = arith.extui %8 : vector<16x128xi1> to vector<16x128xi32>
    %23 = arith.sitofp %22 : vector<16x128xi32> to vector<16x128xf32>
    %24 = vector.shape_cast %21 : vector<16x128xf32> to vector<2x8x128xf32>
    %cst_8 = arith.constant dense<0.000000e+00> : vector<8x128xf32>
    %25 = vector.multi_reduction <add>, %24, %cst_8 [0] : vector<2x8x128xf32> to vector<8x128xf32>
    %26 = arith.addf %3, %25 : vector<8x128xf32>
    %27 = vector.shape_cast %23 : vector<16x128xf32> to vector<2x8x128xf32>
    %cst_9 = arith.constant dense<0.000000e+00> : vector<8x128xf32>
    %28 = vector.multi_reduction <add>, %27, %cst_9 [0] : vector<2x8x128xf32> to vector<8x128xf32>
    %29 = arith.addf %4, %28 : vector<8x128xf32>
    %c0_10 = arith.constant 0 : index
    %c0_11 = arith.constant 0 : index
    %30 = vector.load %arg3[%c0_10, %c0_11] : memref<8x128xf32, #tpu.memory_space<vmem>>, vector<8x128xf32>
    %31 = arith.addf %30, %26 : vector<8x128xf32>
    %c0_12 = arith.constant 0 : index
    %c0_13 = arith.constant 0 : index
    %32 = vector.load %arg3[%c0_12, %c0_13] : memref<8x128xf32, #tpu.memory_space<vmem>>, vector<8x128xf32>
    tpu.vector_store %arg3[%c0_12, %c0_13], %31 {strides = array<i32>} : memref<8x128xf32, #tpu.memory_space<vmem>>, vector<8x128xf32>,
    %c0_14 = arith.constant 0 : index
    %c0_15 = arith.constant 0 : index
    %33 = vector.load %arg4[%c0_14, %c0_15] : memref<8x128xf32, #tpu.memory_space<vmem>>, vector<8x128xf32>
    %34 = arith.addf %33, %29 : vector<8x128xf32>
    %c0_16 = arith.constant 0 : index
    %c0_17 = arith.constant 0 : index
    %35 = vector.load %arg4[%c0_16, %c0_17] : memref<8x128xf32, #tpu.memory_space<vmem>>, vector<8x128xf32>
    tpu.vector_store %arg4[%c0_16, %c0_17], %34 {strides = array<i32>} : memref<8x128xf32, #tpu.memory_space<vmem>>, vector<8x128xf32>,
    return
  }
  func.func @transform_0(%arg0: i32) -> (i32, i32) {
    %c0_i32 = arith.constant 0 : i32
    %c0_i32_0 = arith.constant 0 : i32
    return %arg0, %c0_i32 : i32, i32
  }
  func.func @transform_1(%arg0: i32) -> (i32, i32) {
    %c0_i32 = arith.constant 0 : i32
    %c0_i32_0 = arith.constant 0 : i32
    return %arg0, %c0_i32 : i32, i32
  }
  func.func @transform_2(%arg0: i32) -> (i32, i32) {
    %c0_i32 = arith.constant 0 : i32
    %c0_i32_0 = arith.constant 0 : i32
    %c0_i32_1 = arith.constant 0 : i32
    return %c0_i32, %c0_i32_0 : i32, i32
  }
  func.func @transform_3(%arg0: i32) -> (i32, i32) {
    %c0_i32 = arith.constant 0 : i32
    %c0_i32_0 = arith.constant 0 : i32
    %c0_i32_1 = arith.constant 0 : i32
    return %c0_i32, %c0_i32_0 : i32, i32
  }
}

</mosaic_0001>

<llo_original>
// kernel: tpu_custom_call.1
$region0: #{tpu_custom_call.1}
  #allocation0 [shape = 'u32[]', space=smem, size = 0x4, offset = 0x4, fixed_abs, tag = 'smem constant byte address 0x4 - core index']
  #allocation1 [shape = 'u32[72,128]{1,0:T(1,128)}', space=vmem, size = 0x9000, scoped, tag = 'internal scratch']
  %s0 = inlined_call_operand.hbm [shape: f32[16,128], index: 0, kind: input, shape index: {}]
  %s1 = inlined_call_operand.hbm [shape: f32[16,128], index: 1, kind: input, shape index: {}]
  %s2 = inlined_call_operand.hbm [shape: f32[8,128], index: 2, kind: output, shape index: {0}]
  %s3 = inlined_call_operand.hbm [shape: f32[8,128], index: 3, kind: output, shape index: {1}]
  %4 = xla_tuple %s2, %s3
  %s5 = sld [smem:[#allocation0]]
  $region38: #{tpu_custom_call.1} parent=0
    _
  %s7 = ssub.s32 1, %s5
  %s8 = scalar_select 0, %s7, %s5
  $region1: #{tpu_custom_call.1} parent=0
    #allocation2 [shape = 'u8[8192]{0}', space=vmem, size = 0x2000, scoped, tag = 'input window, operand 0, single buffered']
    #allocation3 [shape = 's32[1]{0}', space=sflag, size = 0x4, scoped, tag = 'scoped memory for tpu_custom_call.1']
    #allocation4 [shape = 's32[1]{0}', space=sflag, size = 0x4, scoped, tag = 'scoped memory for tpu_custom_call.1']
    #allocation5 [shape = 'u8[8192]{0}', space=vmem, size = 0x2000, scoped, tag = 'input window, operand 1, single buffered']
    #allocation6 [shape = 's32[1]{0}', space=sflag, size = 0x4, scoped, tag = 'scoped memory for tpu_custom_call.1']
    #allocation7 [shape = 'u8[4096]{0}', space=vmem, size = 0x1000, scoped, tag = 'output window, operand 0, single buffered']
    #allocation8 [shape = 'u8[4096]{0}', space=vmem, size = 0x1000, scoped, tag = 'output window, operand 1, single buffered']
    #allocation9 [shape = 's32[1]{0}', space=sflag, size = 0x4, scoped, tag = 'scoped memory for tpu_custom_call.1']
    %9 = vsyncpa [#allocation3], 0
    %10 = vsyncpa [#allocation6], 0
    %11 = vsyncpa [#allocation4], 0
    %12 = vsyncpa [#allocation9], 0
    // Predicated region
    $region2: #{tpu_custom_call.1} parent=1 // pred_check
      _
    $region3: #{tpu_custom_call.1} parent=1 // pred_check_branch
      %14 = sbr.rel (0) target = $region5
    $region4: #{tpu_custom_call.1} parent=1 // pred_region
      %16 = vsyncadd [#allocation3], 0
      %s17 = sshll.u32 %s0, 4
      %s18 = int_to_ptr.hbm [resolvable:$true] %s17
      %s19 = sshll.u32 [#allocation2], 4
      %s20 = int_to_ptr.vmem [resolvable:$true] %s19
      %25 = dma.hbm_to_vmem [thread:$0]  %s18, 256, %s20, [#allocation3], 128, 128, 8
    $region5: #{tpu_custom_call.1} parent=1 // pred_fallthru
      _
    // Predicated region
    $region6: #{tpu_custom_call.1} parent=1 // pred_check
      _
    $region7: #{tpu_custom_call.1} parent=1 // pred_check_branch
      %27 = sbr.rel (0) target = $region9
    $region8: #{tpu_custom_call.1} parent=1 // pred_region
      %29 = vsyncadd [#allocation6], 0
      %s30 = sshll.u32 %s1, 4
      %s31 = int_to_ptr.hbm [resolvable:$true] %s30
      %s32 = sshll.u32 [#allocation5], 4
      %s33 = int_to_ptr.vmem [resolvable:$true] %s32
      %38 = dma.hbm_to_vmem [thread:$0]  %s31, 256, %s33, [#allocation6], 128, 128, 8
    $region9: #{tpu_custom_call.1} parent=1 // pred_fallthru
      _
    // Predicated region
    $region10: #{tpu_custom_call.1} parent=1 // pred_check
      _
    $region11: #{tpu_custom_call.1} parent=1 // pred_check_branch
      %40 = sbr.rel (0) target = $region13
    $region12: #{tpu_custom_call.1} parent=1 // pred_region
      %42 = dma.done [#allocation3], 256
    $region13: #{tpu_custom_call.1} parent=1 // pred_fallthru
      _
    // Predicated region
    $region14: #{tpu_custom_call.1} parent=1 // pred_check
      _
    $region15: #{tpu_custom_call.1} parent=1 // pred_check_branch
      %44 = sbr.rel (0) target = $region17
    $region16: #{tpu_custom_call.1} parent=1 // pred_region
      %46 = dma.done [#allocation6], 256
    $region17: #{tpu_custom_call.1} parent=1 // pred_fallthru
      _
    %p47 = scmp.eq.s32.totalorder 0, 0
    // Predicated region
    $region18: #{tpu_custom_call.1} parent=1 // pred_check
      %p48 = pneg %p47
    $region19: #{tpu_custom_call.1} parent=1 // pred_check_branch
      %50 = sbr.rel (%p48) target = $region21
    $region20: #{tpu_custom_call.1} parent=1 // pred_region
      %51 = vst [vmem:[#allocation7] sm:$0xff] 0.0
      %52 = vst [vmem:[#allocation8] sm:$0xff] 0.0
    $region21: #{tpu_custom_call.1} parent=1 // pred_fallthru
      _
    %v53 = vld [vmem:[#allocation2] sm:$0xff]
    %v54 = vld [vmem:[#allocation2 + $0x8] sm:$0xff]
    %v55 = vld [vmem:[#allocation5] sm:$0xff]
    %v56 = vld [vmem:[#allocation5 + $0x8] sm:$0xff]
    %vm57 = vcmp.eq.f32.partialorder %v55, 1.0
    %vm58 = vcmp.eq.f32.partialorder %v56, 1.0
    %v59 = vsub.f32 1.0, %v53
    %v60 = vsub.f32 1.0, %v54
    %v61 = vsub.f32 1.0, %v55
    %v62 = vsub.f32 1.0, %v56
    %v63 = vmul.f32 %v61, %v61
    %v64 = vmul.f32 %v62, %v62
    %v65 = vmul.f32 %v63, %v63
    %v66 = vmul.f32 %v64, %v64
    %v67 = vmul.f32 %v59, %v59
    %v68 = vmul.f32 %v60, %v60
    %v69 = vmul.f32 %v53, %v53
    %v70 = vmul.f32 %v54, %v54
    %v71 = vmul.f32 %v69, %v65
    %v72 = vmul.f32 %v70, %v66
    %v73 = vsel %vm57, %v67, %v71
    %v74 = vsel %vm58, %v68, %v72
    %v75 = vsel %vm57, %v53, %v59
    %v76 = vsel %vm58, %v54, %v60
    %v77 = vlog2.pop %v75
    %v78 = vmul.f32 %v77, 0.6931472
    %v79 = vlog2.pop %v76
    %v80 = vmul.f32 %v79, 0.6931472
    %v81 = vmul.f32 %v78, %v73
    %v82 = vmul.f32 %v80, %v74
    %v83 = vsel %vm57, 1, 0
    %v84 = vsel %vm58, 1, 0
    %v85 = vcvt.s32.f32 %v83
    %v86 = vcvt.s32.f32 %v84
    %v87 = vadd.f32 %v81, %v82
    %v88 = vadd.f32 %v87, 0.0
    %v89 = vadd.f32 %v85, %v86
    %v90 = vadd.f32 %v89, 0.0
    %v91 = vld [vmem:[#allocation7] sm:$0xff]
    %v92 = vadd.f32 %v91, %v88
    %93 = vst [vmem:[#allocation7] sm:$0xff] %v92
    %v94 = vld [vmem:[#allocation8] sm:$0xff]
    %v95 = vadd.f32 %v94, %v90
    %96 = vst [vmem:[#allocation8] sm:$0xff] %v95
    // Predicated region
    $region22: #{tpu_custom_call.1} parent=1 // pred_check
      _
    $region23: #{tpu_custom_call.1} parent=1 // pred_check_branch
      %98 = sbr.rel (0) target = $region25
    $region24: #{tpu_custom_call.1} parent=1 // pred_region
      %100 = vsyncadd [#allocation4], 0
      %s102 = sshll.u32 [#allocation7], 4
      %s103 = int_to_ptr.vmem [resolvable:$true] %s102
      %s104 = sshll.u32 %s2, 4
      %s105 = int_to_ptr.hbm [resolvable:$true] %s104
      %107 = dma.vmem_to_hbm [thread:$0]  %s103, 128, %s105, [#allocation4]
    $region25: #{tpu_custom_call.1} parent=1 // pred_fallthru
      _
    // Predicated region
    $region26: #{tpu_custom_call.1} parent=1 // pred_check
      _
    $region27: #{tpu_custom_call.1} parent=1 // pred_check_branch
      %109 = sbr.rel (0) target = $region29
    $region28: #{tpu_custom_call.1} parent=1 // pred_region
      %111 = vsyncadd [#allocation9], 0
      %s113 = sshll.u32 [#allocation8], 4
      %s114 = int_to_ptr.vmem [resolvable:$true] %s113
      %s115 = sshll.u32 %s3, 4
      %s116 = int_to_ptr.hbm [resolvable:$true] %s115
      %118 = dma.vmem_to_hbm [thread:$0]  %s114, 128, %s116, [#allocation9]
    $region29: #{tpu_custom_call.1} parent=1 // pred_fallthru
      _
    // Predicated region
    $region30: #{tpu_custom_call.1} parent=1 // pred_check
      _
    $region31: #{tpu_custom_call.1} parent=1 // pred_check_branch
      %120 = sbr.rel (0) target = $region33
    $region32: #{tpu_custom_call.1} parent=1 // pred_region
      %122 = dma.done [#allocation4], 128
    $region33: #{tpu_custom_call.1} parent=1 // pred_fallthru
      _
    // Predicated region
    $region34: #{tpu_custom_call.1} parent=1 // pred_check
      _
    $region35: #{tpu_custom_call.1} parent=1 // pred_check_branch
      %124 = sbr.rel (0) target = $region37
    $region36: #{tpu_custom_call.1} parent=1 // pred_region
      %126 = dma.done [#allocation9], 128
    $region37: #{tpu_custom_call.1} parent=1 // pred_fallthru
      _
    %127 = vsyncpa [#allocation3], 1
    %128 = vsyncpa [#allocation6], 1
    %129 = vsyncpa [#allocation4], 1
    %130 = vsyncpa [#allocation9], 1

</llo_original>
